<compile_context>
chip_gen: v7x
topology: tpu7x:2x2x1
jax: 0.10.0
libtpu: 0.0.40
codegen_flags: <defaults>
</compile_context>

<pallas_src>
import functools

import jax
import jax.numpy as jnp
from jax.experimental import pallas as pl
from jax.experimental.pallas import tpu as pltpu


def _cnn_kernel(x_ref, w_ref, b_ref, o_ref, *, l_out, tb):
    """One batch tile.

    x_ref: (L_out * TB, K*C_in)  im2col'd input, time-major within the tile
                                 (row = t*TB + b_local)
    w_ref: (K*C_in, F)           fused conv weight (F on lanes)
    b_ref: (1, F)                bias
    o_ref: (TB, F)               relu(conv) max-pooled over time
    """
    # Single MXU matmul: (L_out*TB, KC) @ (KC, F) -> (L_out*TB, F).
    acc = jnp.dot(x_ref[...], w_ref[...], preferred_element_type=jnp.float32)

    # Global max-pool over time: rows for time t are the aligned sublane slice
    # [t*TB, (t+1)*TB).  Small static unrolled maximum chain on the VPU.
    m = acc[0:tb]
    for t in range(1, l_out):
        m = jnp.maximum(m, acc[t * tb:(t + 1) * tb])

    # max_t relu(a_t + bias) == relu(max_t a_t + bias)  (bias const over t, relu monotone)
    o_ref[...] = jnp.maximum(m + b_ref[...], 0.0)


def _round_up(x, m):
    return (x + m - 1) // m * m


def cnn_forward(char_embeddings, weight, bias, *, kernel_size, batch_tile=128):
    """relu(conv1d(x)) -> max over time.

    char_embeddings: (N, C_in, L)  float32
    weight:          (F, C_in, K)  float32  (PyTorch Conv1d layout)
    bias:            (F,)          float32
    returns:         (N, F)        float32
    """
    n, c_in, l = char_embeddings.shape
    f, c_in_w, k = weight.shape
    assert c_in == c_in_w and k == kernel_size
    l_out = l - kernel_size + 1
    assert l_out >= 1
    kc = kernel_size * c_in

    # ---- wrapper-side layout work (trivial HBM bytes at these sizes) ----
    # im2col: x_col[n, t, k*C_in + c] = x[n, c, t + k]
    cols = jnp.stack(
        [char_embeddings[:, :, j:j + l_out] for j in range(kernel_size)], axis=1
    )                                                    # (N, K, C_in, L_out)
    x_col = jnp.transpose(cols, (0, 3, 1, 2)).reshape(n, l_out, kc)

    # Fused weight: w_fused[k*C_in + c, f] = weight[f, c, k]   (F on lanes)
    w_fused = jnp.transpose(weight, (2, 1, 0)).reshape(kc, f)
    b_2d = bias.reshape(1, f)

    # Batch tiling: TB a multiple of 8; pad N so every tile is full (padded rows are
    # zeros -> relu(bias) garbage that is sliced off below).
    tb = batch_tile if n >= batch_tile else _round_up(n, 8)
    n_pad = _round_up(n, tb)
    if n_pad != n:
        x_col = jnp.pad(x_col, ((0, n_pad - n), (0, 0), (0, 0)))
    n_tiles = n_pad // tb

    # Flatten (batch, time) with time-major ordering *within* each tile so the kernel
    # block is one contiguous 2D slab: flat row ((i*L_out + t)*TB + b).
    x_tiled = (
        x_col.reshape(n_tiles, tb, l_out, kc)
        .transpose(0, 2, 1, 3)
        .reshape(n_tiles * l_out * tb, kc)
    )

    flops = 2 * n_pad * l_out * kc * f + 2 * n_pad * l_out * f
    bytes_accessed = 4 * (n_pad * l_out * kc + kc * f + f + n_pad * f)

    kernel = functools.partial(_cnn_kernel, l_out=l_out, tb=tb)

    out = pl.pallas_call(
        kernel,
        out_shape=jax.ShapeDtypeStruct((n_pad, f), jnp.float32),
        grid_spec=pl.GridSpec(
            grid=(n_tiles,),
            in_specs=[
                pl.BlockSpec((l_out * tb, kc), lambda i: (i, 0)),  # per-tile im2col slab
                pl.BlockSpec((kc, f), lambda i: (0, 0)),           # fused weight (resident)
                pl.BlockSpec((1, f), lambda i: (0, 0)),            # bias (resident)
            ],
            out_specs=pl.BlockSpec((tb, f), lambda i: (i, 0)),     # lane-dense (TB, F) store
        ),
        compiler_params=pltpu.CompilerParams(
            # Batch tiles are independent -> shard across TensorCores on v7x megacore.
            dimension_semantics=("parallel",),
        ),
        cost_estimate=pl.CostEstimate(
            flops=flops, transcendentals=0, bytes_accessed=bytes_accessed),
    )(x_tiled, w_fused, b_2d)

    return out[:n]


def cnn_reference(char_embeddings, weight, bias, *, kernel_size):
    """Pure-JAX reference (same math) for correctness checking."""
    n, c_in, l = char_embeddings.shape
    f = weight.shape[0]
    l_out = l - kernel_size + 1
    acc = jnp.zeros((n, f, l_out), dtype=jnp.float32)
    for k in range(kernel_size):
        acc = acc + jnp.einsum(
            "ncl,fc->nfl", char_embeddings[:, :, k:k + l_out], weight[:, :, k]
        )
    acc = acc + bias[None, :, None]
    return jnp.max(jnp.maximum(acc, 0.0), axis=-1)


if __name__ == "__main__":
    # Small, forward-consistent shapes.
    batch = 2
    max_word_length = 8     # Conv1d in_channels
    embed_len = 16          # Conv1d length dimension
    feature_number = 32     # Conv1d out_channels
    kernel_size = 5

    key = jax.random.PRNGKey(0)
    kx, kw, kb = jax.random.split(key, 3)

    # Deterministic parameter init mimicking PyTorch Conv1d default
    # (uniform(-bound, bound) with bound = 1/sqrt(C_in * K)).
    bound = 1.0 / jnp.sqrt(jnp.float32(max_word_length * kernel_size))
    weight = jax.random.uniform(
        kw, (feature_number, max_word_length, kernel_size),
        dtype=jnp.float32, minval=-bound, maxval=bound)
    bias = jax.random.uniform(
        kb, (feature_number,), dtype=jnp.float32, minval=-bound, maxval=bound)

    x = jax.random.normal(
        kx, (batch, max_word_length, embed_len), dtype=jnp.float32)

    out = cnn_forward(x, weight, bias, kernel_size=kernel_size)
    out = jax.block_until_ready(out)

    ref = cnn_reference(x, weight, bias, kernel_size=kernel_size)
    assert out.shape == (batch, feature_number)
    assert jnp.allclose(out, ref, atol=1e-5, rtol=1e-5), "mismatch vs reference"

    print("KERNEL_OK")
</pallas_src>

<mosaic_0001>
module attributes {stable_mosaic.version = 11 : i64} {
  func.func @_cnn_kernel(%arg0: i32, %arg1: memref<96x40xf32, #tpu.memory_space<vmem>>, %arg2: memref<40x32xf32, #tpu.memory_space<vmem>>, %arg3: memref<1x32xf32, #tpu.memory_space<vmem>>, %arg4: memref<8x32xf32, #tpu.memory_space<vmem>>) attributes {dimension_semantics = [#tpu.dimension_semantics<parallel>], iteration_bounds = array<i64: 1>, scalar_prefetch = 0 : i64, scratch_operands = 0 : i64, tpu.core_type = #tpu.core_type<tc>, window_params = [{transform_indices = @transform_0, window_bounds = array<i64: 96, 40>}, {pipeline_mode = #tpu.pipeline_mode<synchronous>, transform_indices = @transform_1, window_bounds = array<i64: 40, 32>}, {pipeline_mode = #tpu.pipeline_mode<synchronous>, transform_indices = @transform_2, window_bounds = array<i64: 1, 32>}, {transform_indices = @transform_3, window_bounds = array<i64: 8, 32>}]} {
    %c0 = arith.constant 0 : index
    %c0_0 = arith.constant 0 : index
    %0 = vector.load %arg1[%c0, %c0_0] : memref<96x40xf32, #tpu.memory_space<vmem>>, vector<96x40xf32>
    %c0_1 = arith.constant 0 : index
    %c0_2 = arith.constant 0 : index
    %1 = vector.load %arg2[%c0_1, %c0_2] : memref<40x32xf32, #tpu.memory_space<vmem>>, vector<40x32xf32>
    %cst = arith.constant dense<0.000000e+00> : vector<96x32xf32>
    %2 = tpu.matmul %0, %1, %cst {dimension_numbers = #tpu.dot_dimension_numbers<[1], [0], [0], [1], [0, 0, 1, 1], [], []>} : vector<96x40xf32>, vector<40x32xf32>, vector<96x32xf32> -> vector<96x32xf32>
    %3 = vector.extract_strided_slice %2 {offsets = [0, 0], sizes = [8, 32], strides = [1, 1]} : vector<96x32xf32> to vector<8x32xf32>
    %4 = vector.extract_strided_slice %2 {offsets = [8, 0], sizes = [8, 32], strides = [1, 1]} : vector<96x32xf32> to vector<8x32xf32>
    %5 = arith.maximumf %3, %4 : vector<8x32xf32>
    %6 = vector.extract_strided_slice %2 {offsets = [16, 0], sizes = [8, 32], strides = [1, 1]} : vector<96x32xf32> to vector<8x32xf32>
    %7 = arith.maximumf %5, %6 : vector<8x32xf32>
    %8 = vector.extract_strided_slice %2 {offsets = [24, 0], sizes = [8, 32], strides = [1, 1]} : vector<96x32xf32> to vector<8x32xf32>
    %9 = arith.maximumf %7, %8 : vector<8x32xf32>
    %10 = vector.extract_strided_slice %2 {offsets = [32, 0], sizes = [8, 32], strides = [1, 1]} : vector<96x32xf32> to vector<8x32xf32>
    %11 = arith.maximumf %9, %10 : vector<8x32xf32>
    %12 = vector.extract_strided_slice %2 {offsets = [40, 0], sizes = [8, 32], strides = [1, 1]} : vector<96x32xf32> to vector<8x32xf32>
    %13 = arith.maximumf %11, %12 : vector<8x32xf32>
    %14 = vector.extract_strided_slice %2 {offsets = [48, 0], sizes = [8, 32], strides = [1, 1]} : vector<96x32xf32> to vector<8x32xf32>
    %15 = arith.maximumf %13, %14 : vector<8x32xf32>
    %16 = vector.extract_strided_slice %2 {offsets = [56, 0], sizes = [8, 32], strides = [1, 1]} : vector<96x32xf32> to vector<8x32xf32>
    %17 = arith.maximumf %15, %16 : vector<8x32xf32>
    %18 = vector.extract_strided_slice %2 {offsets = [64, 0], sizes = [8, 32], strides = [1, 1]} : vector<96x32xf32> to vector<8x32xf32>
    %19 = arith.maximumf %17, %18 : vector<8x32xf32>
    %20 = vector.extract_strided_slice %2 {offsets = [72, 0], sizes = [8, 32], strides = [1, 1]} : vector<96x32xf32> to vector<8x32xf32>
    %21 = arith.maximumf %19, %20 : vector<8x32xf32>
    %22 = vector.extract_strided_slice %2 {offsets = [80, 0], sizes = [8, 32], strides = [1, 1]} : vector<96x32xf32> to vector<8x32xf32>
    %23 = arith.maximumf %21, %22 : vector<8x32xf32>
    %24 = vector.extract_strided_slice %2 {offsets = [88, 0], sizes = [8, 32], strides = [1, 1]} : vector<96x32xf32> to vector<8x32xf32>
    %25 = arith.maximumf %23, %24 : vector<8x32xf32>
    %c0_3 = arith.constant 0 : index
    %c0_4 = arith.constant 0 : index
    %26 = vector.load %arg3[%c0_3, %c0_4] : memref<1x32xf32, #tpu.memory_space<vmem>>, vector<1x32xf32>
    %27 = vector.broadcast %26 : vector<1x32xf32> to vector<8x32xf32>
    %28 = arith.addf %25, %27 : vector<8x32xf32>
    %cst_5 = arith.constant 0.000000e+00 : f32
    %29 = vector.broadcast %cst_5 : f32 to vector<8x32xf32>
    %30 = arith.maximumf %28, %29 : vector<8x32xf32>
    %c0_6 = arith.constant 0 : index
    %c0_7 = arith.constant 0 : index
    %31 = vector.load %arg4[%c0_6, %c0_7] : memref<8x32xf32, #tpu.memory_space<vmem>>, vector<8x32xf32>
    tpu.vector_store %arg4[%c0_6, %c0_7], %30 {strides = array<i32>} : memref<8x32xf32, #tpu.memory_space<vmem>>, vector<8x32xf32>,
    return
  }
  func.func @transform_0(%arg0: i32) -> (i32, i32) {
    %c0_i32 = arith.constant 0 : i32
    %c0_i32_0 = arith.constant 0 : i32
    return %arg0, %c0_i32 : i32, i32
  }
  func.func @transform_1(%arg0: i32) -> (i32, i32) {
    %c0_i32 = arith.constant 0 : i32
    %c0_i32_0 = arith.constant 0 : i32
    %c0_i32_1 = arith.constant 0 : i32
    return %c0_i32, %c0_i32_0 : i32, i32
  }
  func.func @transform_2(%arg0: i32) -> (i32, i32) {
    %c0_i32 = arith.constant 0 : i32
    %c0_i32_0 = arith.constant 0 : i32
    %c0_i32_1 = arith.constant 0 : i32
    return %c0_i32, %c0_i32_0 : i32, i32
  }
  func.func @transform_3(%arg0: i32) -> (i32, i32) {
    %c0_i32 = arith.constant 0 : i32
    %c0_i32_0 = arith.constant 0 : i32
    return %arg0, %c0_i32 : i32, i32
  }
}

</mosaic_0001>

<llo_original>
// kernel: tpu_custom_call.1
$region0: #{tpu_custom_call.1}
  #allocation0 [shape = 'u32[]', space=smem, size = 0x4, offset = 0x4, fixed_abs, tag = 'smem constant byte address 0x4 - core index']
  #allocation1 [shape = 'u32[144,128]{1,0:T(1,128)}', space=vmem, size = 0x12000, scoped, tag = 'internal scratch']
  %s0 = inlined_call_operand.vmem [shape: f32[96,40], index: 0, kind: input, shape index: {}]
  %s1 = inlined_call_operand.vmem [shape: f32[40,32], index: 1, kind: input, shape index: {}]
  %s2 = inlined_call_operand.vmem [shape: f32[1,32], index: 2, kind: input, shape index: {}]
  %s3 = inlined_call_operand.hbm [shape: f32[8,32], index: 3, kind: output, shape index: {}]
  %s4 = sld [smem:[#allocation0]]
  $region22: #{tpu_custom_call.1} parent=0
    _
  %s6 = ssub.s32 1, %s4
  %s7 = scalar_select 0, %s6, %s4
  $region1: #{tpu_custom_call.1} parent=0
    #allocation2 [shape = 'u8[4096]{0}', space=vmem, size = 0x1000, scoped, tag = 'output window, operand 0, single buffered']
    #allocation3 [shape = 's32[1]{0}', space=sflag, size = 0x4, scoped, tag = 'scoped memory for tpu_custom_call.1']
    %8 = vsyncpa [#allocation3], 0
    // Predicated region
    $region2: #{tpu_custom_call.1} parent=1 // pred_check
      _
    $region3: #{tpu_custom_call.1} parent=1 // pred_check_branch
      %10 = sbr.rel (0) target = $region5
    $region4: #{tpu_custom_call.1} parent=1 // pred_region
      _
    $region5: #{tpu_custom_call.1} parent=1 // pred_fallthru
      _
    // Predicated region
    $region6: #{tpu_custom_call.1} parent=1 // pred_check
      _
    $region7: #{tpu_custom_call.1} parent=1 // pred_check_branch
      %12 = sbr.rel (0) target = $region9
    $region8: #{tpu_custom_call.1} parent=1 // pred_region
      _
    $region9: #{tpu_custom_call.1} parent=1 // pred_fallthru
      _
    // Predicated region
    $region10: #{tpu_custom_call.1} parent=1 // pred_check
      _
    $region11: #{tpu_custom_call.1} parent=1 // pred_check_branch
      %14 = sbr.rel (0) target = $region13
    $region12: #{tpu_custom_call.1} parent=1 // pred_region
      _
    $region13: #{tpu_custom_call.1} parent=1 // pred_fallthru
      _
    %v15 = vld [vmem:[%s0] sm:$0xff]
    %v16 = vld [vmem:[%s0 + $0x8] sm:$0xff]
    %v17 = vld [vmem:[%s0 + $0x10] sm:$0xff]
    %v18 = vld [vmem:[%s0 + $0x18] sm:$0xff]
    %v19 = vld [vmem:[%s0 + $0x20] sm:$0xff]
    %v20 = vld [vmem:[%s0 + $0x28] sm:$0xff]
    %v21 = vld [vmem:[%s0 + $0x30] sm:$0xff]
    %v22 = vld [vmem:[%s0 + $0x38] sm:$0xff]
    %v23 = vld [vmem:[%s0 + $0x40] sm:$0xff]
    %v24 = vld [vmem:[%s0 + $0x48] sm:$0xff]
    %v25 = vld [vmem:[%s0 + $0x50] sm:$0xff]
    %v26 = vld [vmem:[%s0 + $0x58] sm:$0xff]
    %v27 = vld [vmem:[%s1] sm:$0xff]
    %v28 = vld [vmem:[%s1 + $0x8] sm:$0xff]
    %v29 = vld [vmem:[%s1 + $0x10] sm:$0xff]
    %v30 = vld [vmem:[%s1 + $0x18] sm:$0xff]
    %v31 = vld [vmem:[%s1 + $0x20] sm:$0xff]
    %vm32 = vcmask 326656
    %v34 = vsel %vm32, %v15, 0
    %v37 = vsel %vm32, %v16, 0
    %v40 = vsel %vm32, %v17, 0
    %v43 = vsel %vm32, %v18, 0
    %v46 = vsel %vm32, %v19, 0
    %v49 = vsel %vm32, %v20, 0
    %v52 = vsel %vm32, %v21, 0
    %v55 = vsel %vm32, %v22, 0
    %v58 = vsel %vm32, %v23, 0
    %v61 = vsel %vm32, %v24, 0
    %v64 = vsel %vm32, %v25, 0
    %v67 = vsel %vm32, %v26, 0
    %69 = vmatprep.subr.mxu0 0.0
    %70 = vmatpush1.msra.mxu0 %v27
    %71 = vmatprep.subr.mxu0 0.0
    %72 = vmatpush1.msra.mxu0 %v28
    %73 = vmatprep.subr.mxu0 0.0
    %74 = vmatpush1.msra.mxu0 %v29
    %75 = vmatprep.subr.mxu0 0.0
    %76 = vmatpush1.msra.mxu0 %v30
    %77 = vmatprep.subr.mxu0 0.0
    %78 = vmatpush1.msra.mxu0 %v31
    %79 = vmatprep.subr.mxu0 0.0
    %80 = vmatpush1.msra.mxu0 0.0
    %81 = vmatprep.subr.mxu0 0.0
    %82 = vmatpush1.msra.mxu0 0.0
    %83 = vmatprep.subr.mxu0 0.0
    %84 = vmatpush1.msra.mxu0 0.0
    %85 = vmatprep.subr.mxu0 0.0
    %86 = vmatpush1.msra.mxu0 0.0
    %87 = vmatprep.subr.mxu0 0.0
    %88 = vmatpush1.msra.mxu0 0.0
    %89 = vmatprep.subr.mxu0 0.0
    %90 = vmatpush1.msra.mxu0 0.0
    %91 = vmatprep.subr.mxu0 0.0
    %92 = vmatpush1.msra.mxu0 0.0
    %93 = vmatprep.subr.mxu0 0.0
    %94 = vmatpush1.msra.mxu0 0.0
    %95 = vmatprep.subr.mxu0 0.0
    %96 = vmatpush1.msra.mxu0 0.0
    %97 = vmatprep.subr.mxu0 0.0
    %98 = vmatpush1.msra.mxu0 0.0
    %99 = vmatprep.subr.mxu0 0.0
    %100 = vmatpush1.msra.mxu0 0.0
    %101 = vmatprep.subr.mxu0 0.0
    %102 = vmatpush1.msra.mxu0 0.0
    %103 = vmatprep.subr.mxu0 0.0
    %104 = vmatpush1.msra.mxu0 0.0
    %105 = vmatprep.subr.mxu0 0.0
    %106 = vmatpush1.msra.mxu0 0.0
    %107 = vmatprep.subr.mxu0 0.0
    %108 = vmatpush1.msra.mxu0 0.0
    %109 = vmatprep.subr.mxu0 0.0
    %110 = vmatpush1.msra.mxu0 0.0
    %111 = vmatprep.subr.mxu0 0.0
    %112 = vmatpush1.msra.mxu0 0.0
    %113 = vmatprep.subr.mxu0 0.0
    %114 = vmatpush1.msra.mxu0 0.0
    %115 = vmatprep.subr.mxu0 0.0
    %116 = vmatpush1.msra.mxu0 0.0
    %117 = vmatprep.subr.mxu0 0.0
    %118 = vmatpush1.msra.mxu0 0.0
    %119 = vmatprep.subr.mxu0 0.0
    %120 = vmatpush1.msra.mxu0 0.0
    %121 = vmatprep.subr.mxu0 0.0
    %122 = vmatpush1.msra.mxu0 0.0
    %123 = vmatprep.subr.mxu0 0.0
    %124 = vmatpush1.msra.mxu0 0.0
    %125 = vmatprep.subr.mxu0 0.0
    %126 = vmatpush1.msra.mxu0 0.0
    %127 = vmatprep.subr.mxu0 0.0
    %128 = vmatpush1.msra.mxu0 0.0
    %129 = vmatprep.subr.mxu0 0.0
    %130 = vmatpush1.msra.mxu0 0.0
    %131 = vmatprep.subr.mxu0 0.0
    %132 = vmatpush1.msra.mxu0 0.0
    %133 = vmatprep.mubr.f32.mxu0 0.0
    %134 = vmatmul.mubr.f32.gmra.mrb[0].mxu0 %v34
    %v135 = vpop.f32.mrb[0].mxu0
    %v136 = vadd.f32 0.0, %v135
    %v137 = vpop.f32.mrb[0].mxu0
    %138 = vmatprep.mubr.f32.mxu0 0.0
    %139 = vmatmul.mubr.f32.gmra.mrb[0].mxu0 %v37
    %v140 = vpop.f32.mrb[0].mxu0
    %v141 = vadd.f32 0.0, %v140
    %v142 = vpop.f32.mrb[0].mxu0
    %143 = vmatprep.mubr.f32.mxu0 0.0
    %144 = vmatmul.mubr.f32.gmra.mrb[0].mxu0 %v40
    %v145 = vpop.f32.mrb[0].mxu0
    %v146 = vadd.f32 0.0, %v145
    %v147 = vpop.f32.mrb[0].mxu0
    %148 = vmatprep.mubr.f32.mxu0 0.0
    %149 = vmatmul.mubr.f32.gmra.mrb[0].mxu0 %v43
    %v150 = vpop.f32.mrb[0].mxu0
    %v151 = vadd.f32 0.0, %v150
    %v152 = vpop.f32.mrb[0].mxu0
    %153 = vmatprep.mubr.f32.mxu0 0.0
    %154 = vmatmul.mubr.f32.gmra.mrb[0].mxu0 %v46
    %v155 = vpop.f32.mrb[0].mxu0
    %v156 = vadd.f32 0.0, %v155
    %v157 = vpop.f32.mrb[0].mxu0
    %158 = vmatprep.mubr.f32.mxu0 0.0
    %159 = vmatmul.mubr.f32.gmra.mrb[0].mxu0 %v49
    %v160 = vpop.f32.mrb[0].mxu0
    %v161 = vadd.f32 0.0, %v160
    %v162 = vpop.f32.mrb[0].mxu0
    %163 = vmatprep.mubr.f32.mxu0 0.0
    %164 = vmatmul.mubr.f32.gmra.mrb[0].mxu0 %v52
    %v165 = vpop.f32.mrb[0].mxu0
    %v166 = vadd.f32 0.0, %v165
    %v167 = vpop.f32.mrb[0].mxu0
    %168 = vmatprep.mubr.f32.mxu0 0.0
    %169 = vmatmul.mubr.f32.gmra.mrb[0].mxu0 %v55
    %v170 = vpop.f32.mrb[0].mxu0
    %v171 = vadd.f32 0.0, %v170
    %v172 = vpop.f32.mrb[0].mxu0
    %173 = vmatprep.mubr.f32.mxu0 0.0
    %174 = vmatmul.mubr.f32.gmra.mrb[0].mxu0 %v58
    %v175 = vpop.f32.mrb[0].mxu0
    %v176 = vadd.f32 0.0, %v175
    %v177 = vpop.f32.mrb[0].mxu0
    %178 = vmatprep.mubr.f32.mxu0 0.0
    %179 = vmatmul.mubr.f32.gmra.mrb[0].mxu0 %v61
    %v180 = vpop.f32.mrb[0].mxu0
    %v181 = vadd.f32 0.0, %v180
    %v182 = vpop.f32.mrb[0].mxu0
    %183 = vmatprep.mubr.f32.mxu0 0.0
    %184 = vmatmul.mubr.f32.gmra.mrb[0].mxu0 %v64
    %v185 = vpop.f32.mrb[0].mxu0
    %v186 = vadd.f32 0.0, %v185
    %v187 = vpop.f32.mrb[0].mxu0
    %188 = vmatprep.mubr.f32.mxu0 0.0
    %189 = vmatmul.mubr.f32.gmra.mrb[0].mxu0 %v67
    %v190 = vpop.f32.mrb[0].mxu0
    %v191 = vadd.f32 0.0, %v190
    %v192 = vpop.f32.mrb[0].mxu0
    %193 = vdwg.mxu0
    %v194 = vmax.f32 %v136, %v141
    %v195 = vmax.f32 %v194, %v146
    %v196 = vmax.f32 %v195, %v151
    %v197 = vmax.f32 %v196, %v156
    %v198 = vmax.f32 %v197, %v161
    %v199 = vmax.f32 %v198, %v166
    %v200 = vmax.f32 %v199, %v171
    %v201 = vmax.f32 %v200, %v176
    %v202 = vmax.f32 %v201, %v181
    %v203 = vmax.f32 %v202, %v186
    %v204 = vmax.f32 %v203, %v191
    %v205 = vld [vmem:[%s2] sm:$0x1]
    %v207 = vlaneseq
    %v208 = vshrl.u32 %v207, 7
    %v209 = vsub.s32 0, %v208
    %v210 = vrot.slane %v205, %v209
    %v212 = vadd.f32 %v204, %v210
    %v213 = vmax.f32 %v212, 0.0
    %vm214 = vcmask 261120
    %215 = vst.msk [vmem:[#allocation2] sm:$0xff] %vm214, %v213
    // Predicated region
    $region14: #{tpu_custom_call.1} parent=1 // pred_check
      _
    $region15: #{tpu_custom_call.1} parent=1 // pred_check_branch
      %217 = sbr.rel (0) target = $region17
    $region16: #{tpu_custom_call.1} parent=1 // pred_region
      %s219 = ssub.s32 128, 128
      %220 = vsyncadd [#allocation3], %s219
      %s222 = sshll.u32 [#allocation2], 4
      %s223 = int_to_ptr.vmem [resolvable:$true] %s222
      %225 = dma.vmem_to_hbm [thread:$0]  %s223, 128, %s3, [#allocation3]
    $region17: #{tpu_custom_call.1} parent=1 // pred_fallthru
      _
    // Predicated region
    $region18: #{tpu_custom_call.1} parent=1 // pred_check
      _
    $region19: #{tpu_custom_call.1} parent=1 // pred_check_branch
      %227 = sbr.rel (0) target = $region21
    $region20: #{tpu_custom_call.1} parent=1 // pred_region
      %228 = dma.done [#allocation3], 128
    $region21: #{tpu_custom_call.1} parent=1 // pred_fallthru
      _
    %229 = vsyncpa [#allocation3], 1

</llo_original>
